<compile_context>
chip_gen: v6e
topology: v6e:2x2x1
jax: 0.10.0
libtpu: 0.0.40
codegen_flags: <defaults>
</compile_context>

<pallas_src>
import functools
import math

import numpy as np
import jax
import jax.numpy as jnp
from jax import lax
from jax.experimental import pallas as pl
from jax.experimental.pallas import tpu as pltpu


def _round_up(a, b):
    return (a + b - 1) // b * b


def _logdrc_kernel(x_ref, u_ref, c_ref, o_ref, g_prev_ref, *,
                   thr, T, Tb, L, n_chunks, need_t_mask):
    # x_ref, o_ref: (Bb, Tb);  u_ref: (L, L);  c_ref: (1, L);
    # g_prev_ref: (Bb, 1) VMEM scratch carried across the T grid axis.
    t = pl.program_id(1)

    @pl.when(t == 0)
    def _():
        # zi = ones(B): fresh carry at the start of every batch-row block.
        g_prev_ref[...] = jnp.ones(g_prev_ref.shape, g_prev_ref.dtype)

    inv_thr = 1.0 / thr
    u = u_ref[...]                       # (L, L) scan matrix (resident)
    c = c_ref[...]                       # (1, L) carry coefficients
    g_prev = g_prev_ref[...]             # (Bb, 1)

    for k in range(n_chunks):            # small static unroll (Tb // L <= 4)
        xk = x_ref[:, k * L:(k + 1) * L].astype(jnp.float32)   # (Bb, L)
        if need_t_mask:
            # Ragged time edge: zero out-of-range steps so f -> 1 exactly and
            # padded garbage (whose outputs are dropped anyway) can never turn
            # into NaN/inf that would pollute valid columns via the matmul.
            lane = lax.broadcasted_iota(jnp.int32, (1, L), 1) + (t * Tb + k * L)
            xk = jnp.where(lane < T, xk, 0.0)

        x_thr = jnp.maximum(xk, thr) * inv_thr                 # >= 1
        d = x_thr - 1.0
        # f = log(x_thr)/(x_thr-1).  The removable singularity at d == 0 and
        # the tiny-d region (where an approx reciprocal could overflow) take
        # the 2nd-order series 1 - d/2; the unselected inf/NaN branch of the
        # select is discarded.
        f = jnp.where(d < 1e-6, 1.0 - 0.5 * d,
                      jnp.log(x_thr) * pl.reciprocal(d, approx=True))

        # Blocked linear recurrence on the MXU: g = f @ U + g_prev * c.
        g = jnp.dot(f, u, preferred_element_type=jnp.float32)
        g = g + g_prev * c                                     # (Bb,1)*(1,L)

        o_ref[:, k * L:(k + 1) * L] = (xk * g * inv_thr).astype(o_ref.dtype)
        g_prev = g[:, -1:]                                     # chain carry

    g_prev_ref[...] = g_prev


def logdrc_pallas(x, fs=16000.0, tau=0.1, thr=1e-5, *,
                  block_b=512, block_t=512, out_dtype=None):
    # TODO(synk): the torch module asserts x >= 0 at runtime; no in-kernel
    # assert is emitted (callers must pass non-negative inputs).
    alpha = 1.0 - math.exp(-1.0 / (fs * tau))
    beta = 1.0 - alpha

    inshape = x.shape
    T = inshape[-1]
    xf = x.reshape(-1, T)                                   # (B, T), free view
    B = xf.shape[0]
    out_dtype = x.dtype if out_dtype is None else out_dtype

    # ---- tile selection (no wrapper-side padding; ragged edges are handled
    # by Pallas partial blocks + in-kernel masking of the time axis) ----------
    if T < 128:
        Tb = T                              # full-dim block for tiny sequences
    else:
        Tb = min(_round_up(block_t, 128), _round_up(T, 128))
    # Scan-matmul chunk: match the 256x256 MXU (v6e/v7x); 128 if Tb is an odd
    # multiple of 128; the full block for tiny T.
    L = Tb if Tb < 256 else (256 if Tb % 256 == 0 else 128)
    n_chunks = Tb // L
    need_t_mask = (T % Tb) != 0

    if B < 8:
        Bb = B                              # full-dim block for tiny batches
    else:
        Bb = min(_round_up(block_b, 8), _round_up(B, 8))
        if B >= 16:
            # Ensure >= 2 batch blocks so both v7x TensorCores get work.
            Bb = min(Bb, _round_up(_round_up(B, 8) // 2, 8))

    grid = (pl.cdiv(B, Bb), pl.cdiv(T, Tb))

    # Host-side constants for the blocked recurrence (chunk-sized, so VMEM
    # stays flat no matter how large Tb grows):
    #   U[j, i] = alpha * beta^(i-j) for j <= i (else 0);  c[i] = beta^(i+1)
    idx = np.arange(L)
    k = idx[None, :] - idx[:, None]                         # k[j, i] = i - j
    U = np.where(k >= 0, alpha * (beta ** np.maximum(k, 0)), 0.0).astype(np.float32)
    c = (beta ** (idx + 1.0)).astype(np.float32)[None, :]

    out = pl.pallas_call(
        functools.partial(_logdrc_kernel, thr=thr, T=T, Tb=Tb, L=L,
                          n_chunks=n_chunks, need_t_mask=need_t_mask),
        out_shape=jax.ShapeDtypeStruct((B, T), out_dtype),
        grid_spec=pltpu.PrefetchScalarGridSpec(
            num_scalar_prefetch=0,
            grid=grid,
            in_specs=[
                pl.BlockSpec((Bb, Tb), lambda b, t: (b, t)),    # x block
                pl.BlockSpec((L, L), lambda b, t: (0, 0)),      # U (resident)
                pl.BlockSpec((1, L), lambda b, t: (0, 0)),      # c (resident)
            ],
            out_specs=pl.BlockSpec((Bb, Tb), lambda b, t: (b, t)),
            scratch_shapes=[pltpu.VMEM((Bb, 1), jnp.float32)],
        ),
        compiler_params=pltpu.CompilerParams(
            # Batch blocks are independent (megacore-parallel); time blocks
            # carry the recurrence -> arbitrary, iterated last.
            dimension_semantics=("parallel", "arbitrary"),
            vmem_limit_bytes=32 * 1024 * 1024,
        ),
    )(xf, jnp.asarray(U), jnp.asarray(c))

    return out.reshape(inshape)


def logdrc_ref(x, fs=16000.0, tau=0.1, thr=1e-5):
    """Pure-JAX reference (mirrors the torch forward)."""
    alpha = 1.0 - math.exp(-1.0 / (fs * tau))
    inshape = x.shape
    xf = x.reshape(-1, x.shape[-1]).astype(jnp.float32)
    x_thr = jnp.maximum(xf, thr) / thr
    f = jnp.where(x_thr == 1.0, 1.0, jnp.log(x_thr) / (x_thr - 1.0))

    def step(g, ft):
        g = alpha * ft + (1.0 - alpha) * g
        return g, g

    _, gs = lax.scan(step, jnp.ones((xf.shape[0],), jnp.float32), f.T)
    g = gs.T
    return (xf * g / thr).astype(x.dtype).reshape(inshape)


if __name__ == "__main__":
    key = jax.random.PRNGKey(0)
    k1, k2 = jax.random.split(key)

    # Case 1 (defaults): one 512-wide time block -> two in-kernel scan chunks
    # chained through the carry, plus ragged-edge time masking (T = 500);
    # the zeroed samples exercise the x <= thr (f -> 1) path.
    x1 = jax.random.uniform(k1, (2, 4, 500), dtype=jnp.float32)
    x1 = x1.at[0, 0, :8].set(0.0)

    # Case 2 (small tiles): the recurrence carry crosses grid blocks along T
    # (two 256-wide blocks for T = 300) and the batch axis has a partial edge
    # block (B = 18, Bb = 8).
    x2 = jax.random.uniform(k2, (3, 6, 300), dtype=jnp.float32)

    for x, kw in ((x1, {}), (x2, dict(block_b=8, block_t=256))):
        out = jax.block_until_ready(logdrc_pallas(x, **kw))
        ref = logdrc_ref(x)
        assert out.shape == x.shape and out.dtype == x.dtype
        err = float(jnp.max(jnp.abs(out - ref) / (jnp.abs(ref) + 1.0)))
        assert err < 1e-3, f"max scaled error {err}"
    print("KERNEL_OK")
</pallas_src>

<mosaic_0001>
module attributes {stable_mosaic.version = 11 : i64} {
  func.func @_logdrc_kernel(%arg0: i32, %arg1: i32, %arg2: memref<8x512xf32, #tpu.memory_space<vmem>>, %arg3: memref<256x256xf32, #tpu.memory_space<vmem>>, %arg4: memref<1x256xf32, #tpu.memory_space<vmem>>, %arg5: memref<8x512xf32, #tpu.memory_space<vmem>>, %arg6: memref<8x1xf32, #tpu.memory_space<vmem>>) attributes {dimension_semantics = [#tpu.dimension_semantics<parallel>, #tpu.dimension_semantics<arbitrary>], iteration_bounds = array<i64: 1, 1>, scalar_prefetch = 0 : i64, scratch_operands = 1 : i64, tpu.core_type = #tpu.core_type<tc>, window_params = [{transform_indices = @transform_0, window_bounds = array<i64: 8, 512>}, {pipeline_mode = #tpu.pipeline_mode<synchronous>, transform_indices = @transform_1, window_bounds = array<i64: 256, 256>}, {pipeline_mode = #tpu.pipeline_mode<synchronous>, transform_indices = @transform_2, window_bounds = array<i64: 1, 256>}, {transform_indices = @transform_3, window_bounds = array<i64: 8, 512>}]} {
    %c0_i32 = arith.constant 0 : i32
    %0 = arith.cmpi eq, %arg1, %c0_i32 : i32
    %1 = arith.extui %0 : i1 to i32
    %c0_i32_0 = arith.constant 0 : i32
    %2 = arith.cmpi ne, %1, %c0_i32_0 : i32
    scf.if %2 {
      %cst_35 = arith.constant 1.000000e+00 : f32
      %83 = vector.broadcast %cst_35 : f32 to vector<8x1xf32>
      %c0_36 = arith.constant 0 : index
      %c0_37 = arith.constant 0 : index
      %84 = vector.load %arg6[%c0_36, %c0_37] : memref<8x1xf32, #tpu.memory_space<vmem>>, vector<8x1xf32>
      tpu.vector_store %arg6[%c0_36, %c0_37], %83 {strides = array<i32>} : memref<8x1xf32, #tpu.memory_space<vmem>>, vector<8x1xf32>,
    } else {
    }
    %c0 = arith.constant 0 : index
    %c0_1 = arith.constant 0 : index
    %3 = vector.load %arg3[%c0, %c0_1] : memref<256x256xf32, #tpu.memory_space<vmem>>, vector<256x256xf32>
    %c0_2 = arith.constant 0 : index
    %c0_3 = arith.constant 0 : index
    %4 = vector.load %arg4[%c0_2, %c0_3] : memref<1x256xf32, #tpu.memory_space<vmem>>, vector<1x256xf32>
    %c0_4 = arith.constant 0 : index
    %c0_5 = arith.constant 0 : index
    %5 = vector.load %arg6[%c0_4, %c0_5] : memref<8x1xf32, #tpu.memory_space<vmem>>, vector<8x1xf32>
    %c0_6 = arith.constant 0 : index
    %c0_7 = arith.constant 0 : index
    %6 = vector.load %arg2[%c0_6, %c0_7] : memref<8x512xf32, #tpu.memory_space<vmem>>, vector<8x256xf32>
    %7 = tpu.iota {dimensions = array<i32: 1>} : vector<1x256xi32>
    %c512_i32 = arith.constant 512 : i32
    %8 = arith.muli %arg1, %c512_i32 : i32
    %c0_i32_8 = arith.constant 0 : i32
    %9 = arith.addi %8, %c0_i32_8 : i32
    %10 = vector.broadcast %9 : i32 to vector<1x256xi32>
    %11 = arith.addi %7, %10 : vector<1x256xi32>
    %c500_i32 = arith.constant 500 : i32
    %12 = vector.broadcast %c500_i32 : i32 to vector<1x256xi32>
    %13 = arith.cmpi slt, %11, %12 : vector<1x256xi32>
    %cst = arith.constant 0.000000e+00 : f32
    %14 = vector.shape_cast %13 : vector<1x256xi1> to vector<1x256xi1>
    %15 = vector.broadcast %14 : vector<1x256xi1> to vector<8x256xi1>
    %16 = vector.broadcast %cst : f32 to vector<8x256xf32>
    %17 = arith.select %15, %6, %16 : vector<8x256xi1>, vector<8x256xf32>
    %cst_9 = arith.constant 9.99999974E-6 : f32
    %18 = vector.broadcast %cst_9 : f32 to vector<8x256xf32>
    %19 = arith.maximumf %17, %18 : vector<8x256xf32>
    %cst_10 = arith.constant 1.000000e+05 : f32
    %20 = vector.broadcast %cst_10 : f32 to vector<8x256xf32>
    %21 = arith.mulf %19, %20 : vector<8x256xf32>
    %cst_11 = arith.constant 1.000000e+00 : f32
    %22 = vector.broadcast %cst_11 : f32 to vector<8x256xf32>
    %23 = arith.subf %21, %22 : vector<8x256xf32>
    %cst_12 = arith.constant 9.99999997E-7 : f32
    %24 = vector.broadcast %cst_12 : f32 to vector<8x256xf32>
    %25 = arith.cmpf olt, %23, %24 : vector<8x256xf32>
    %cst_13 = arith.constant 5.000000e-01 : f32
    %26 = vector.broadcast %cst_13 : f32 to vector<8x256xf32>
    %27 = arith.mulf %26, %23 : vector<8x256xf32>
    %cst_14 = arith.constant 1.000000e+00 : f32
    %28 = vector.broadcast %cst_14 : f32 to vector<8x256xf32>
    %29 = arith.subf %28, %27 : vector<8x256xf32>
    %30 = math.log %21 : vector<8x256xf32>
    %31 = tpu.reciprocal %23 {approx = true} : vector<8x256xf32> -> vector<8x256xf32>
    %32 = arith.mulf %30, %31 : vector<8x256xf32>
    %33 = arith.select %25, %29, %32 : vector<8x256xi1>, vector<8x256xf32>
    %cst_15 = arith.constant dense<0.000000e+00> : vector<8x256xf32>
    %34 = tpu.matmul %33, %3, %cst_15 {dimension_numbers = #tpu.dot_dimension_numbers<[1], [0], [0], [1], [0, 0, 1, 1], [], []>} : vector<8x256xf32>, vector<256x256xf32>, vector<8x256xf32> -> vector<8x256xf32>
    %35 = vector.broadcast %5 : vector<8x1xf32> to vector<8x256xf32>
    %36 = vector.broadcast %4 : vector<1x256xf32> to vector<8x256xf32>
    %37 = arith.mulf %35, %36 : vector<8x256xf32>
    %38 = arith.addf %34, %37 : vector<8x256xf32>
    %39 = arith.mulf %17, %38 : vector<8x256xf32>
    %cst_16 = arith.constant 1.000000e+05 : f32
    %40 = vector.broadcast %cst_16 : f32 to vector<8x256xf32>
    %41 = arith.mulf %39, %40 : vector<8x256xf32>
    %c0_17 = arith.constant 0 : index
    %c0_18 = arith.constant 0 : index
    %42 = vector.load %arg5[%c0_17, %c0_18] : memref<8x512xf32, #tpu.memory_space<vmem>>, vector<8x256xf32>
    tpu.vector_store %arg5[%c0_17, %c0_18], %41 {strides = array<i32>} : memref<8x512xf32, #tpu.memory_space<vmem>>, vector<8x256xf32>,
    %43 = vector.extract_strided_slice %38 {offsets = [0, 255], sizes = [8, 1], strides = [1, 1]} : vector<8x256xf32> to vector<8x1xf32>
    %c0_19 = arith.constant 0 : index
    %c256 = arith.constant 256 : index
    %44 = vector.load %arg2[%c0_19, %c256] : memref<8x512xf32, #tpu.memory_space<vmem>>, vector<8x256xf32>
    %45 = tpu.iota {dimensions = array<i32: 1>} : vector<1x256xi32>
    %c512_i32_20 = arith.constant 512 : i32
    %46 = arith.muli %arg1, %c512_i32_20 : i32
    %c256_i32 = arith.constant 256 : i32
    %47 = arith.addi %46, %c256_i32 : i32
    %48 = vector.broadcast %47 : i32 to vector<1x256xi32>
    %49 = arith.addi %45, %48 : vector<1x256xi32>
    %c500_i32_21 = arith.constant 500 : i32
    %50 = vector.broadcast %c500_i32_21 : i32 to vector<1x256xi32>
    %51 = arith.cmpi slt, %49, %50 : vector<1x256xi32>
    %cst_22 = arith.constant 0.000000e+00 : f32
    %52 = vector.shape_cast %51 : vector<1x256xi1> to vector<1x256xi1>
    %53 = vector.broadcast %52 : vector<1x256xi1> to vector<8x256xi1>
    %54 = vector.broadcast %cst_22 : f32 to vector<8x256xf32>
    %55 = arith.select %53, %44, %54 : vector<8x256xi1>, vector<8x256xf32>
    %cst_23 = arith.constant 9.99999974E-6 : f32
    %56 = vector.broadcast %cst_23 : f32 to vector<8x256xf32>
    %57 = arith.maximumf %55, %56 : vector<8x256xf32>
    %cst_24 = arith.constant 1.000000e+05 : f32
    %58 = vector.broadcast %cst_24 : f32 to vector<8x256xf32>
    %59 = arith.mulf %57, %58 : vector<8x256xf32>
    %cst_25 = arith.constant 1.000000e+00 : f32
    %60 = vector.broadcast %cst_25 : f32 to vector<8x256xf32>
    %61 = arith.subf %59, %60 : vector<8x256xf32>
    %cst_26 = arith.constant 9.99999997E-7 : f32
    %62 = vector.broadcast %cst_26 : f32 to vector<8x256xf32>
    %63 = arith.cmpf olt, %61, %62 : vector<8x256xf32>
    %cst_27 = arith.constant 5.000000e-01 : f32
    %64 = vector.broadcast %cst_27 : f32 to vector<8x256xf32>
    %65 = arith.mulf %64, %61 : vector<8x256xf32>
    %cst_28 = arith.constant 1.000000e+00 : f32
    %66 = vector.broadcast %cst_28 : f32 to vector<8x256xf32>
    %67 = arith.subf %66, %65 : vector<8x256xf32>
    %68 = math.log %59 : vector<8x256xf32>
    %69 = tpu.reciprocal %61 {approx = true} : vector<8x256xf32> -> vector<8x256xf32>
    %70 = arith.mulf %68, %69 : vector<8x256xf32>
    %71 = arith.select %63, %67, %70 : vector<8x256xi1>, vector<8x256xf32>
    %cst_29 = arith.constant dense<0.000000e+00> : vector<8x256xf32>
    %72 = tpu.matmul %71, %3, %cst_29 {dimension_numbers = #tpu.dot_dimension_numbers<[1], [0], [0], [1], [0, 0, 1, 1], [], []>} : vector<8x256xf32>, vector<256x256xf32>, vector<8x256xf32> -> vector<8x256xf32>
    %73 = vector.broadcast %43 : vector<8x1xf32> to vector<8x256xf32>
    %74 = vector.broadcast %4 : vector<1x256xf32> to vector<8x256xf32>
    %75 = arith.mulf %73, %74 : vector<8x256xf32>
    %76 = arith.addf %72, %75 : vector<8x256xf32>
    %77 = arith.mulf %55, %76 : vector<8x256xf32>
    %cst_30 = arith.constant 1.000000e+05 : f32
    %78 = vector.broadcast %cst_30 : f32 to vector<8x256xf32>
    %79 = arith.mulf %77, %78 : vector<8x256xf32>
    %c0_31 = arith.constant 0 : index
    %c256_32 = arith.constant 256 : index
    %80 = vector.load %arg5[%c0_31, %c256_32] : memref<8x512xf32, #tpu.memory_space<vmem>>, vector<8x256xf32>
    tpu.vector_store %arg5[%c0_31, %c256_32], %79 {strides = array<i32>} : memref<8x512xf32, #tpu.memory_space<vmem>>, vector<8x256xf32>,
    %81 = vector.extract_strided_slice %76 {offsets = [0, 255], sizes = [8, 1], strides = [1, 1]} : vector<8x256xf32> to vector<8x1xf32>
    %c0_33 = arith.constant 0 : index
    %c0_34 = arith.constant 0 : index
    %82 = vector.load %arg6[%c0_33, %c0_34] : memref<8x1xf32, #tpu.memory_space<vmem>>, vector<8x1xf32>
    tpu.vector_store %arg6[%c0_33, %c0_34], %81 {strides = array<i32>} : memref<8x1xf32, #tpu.memory_space<vmem>>, vector<8x1xf32>,
    return
  }
  func.func @transform_0(%arg0: i32, %arg1: i32) -> (i32, i32) {
    %c0_i32 = arith.constant 0 : i32
    return %arg0, %arg1 : i32, i32
  }
  func.func @transform_1(%arg0: i32, %arg1: i32) -> (i32, i32) {
    %c0_i32 = arith.constant 0 : i32
    %c0_i32_0 = arith.constant 0 : i32
    %c0_i32_1 = arith.constant 0 : i32
    return %c0_i32, %c0_i32_0 : i32, i32
  }
  func.func @transform_2(%arg0: i32, %arg1: i32) -> (i32, i32) {
    %c0_i32 = arith.constant 0 : i32
    %c0_i32_0 = arith.constant 0 : i32
    %c0_i32_1 = arith.constant 0 : i32
    return %c0_i32, %c0_i32_0 : i32, i32
  }
  func.func @transform_3(%arg0: i32, %arg1: i32) -> (i32, i32) {
    %c0_i32 = arith.constant 0 : i32
    return %arg0, %arg1 : i32, i32
  }
}

</mosaic_0001>

<llo_original>
// kernel: tpu_custom_call.1
$region0: #{tpu_custom_call.1}
  #allocation0 [shape = 'u32[]', space=smem, size = 0x4, offset = 0x4, fixed_abs, tag = 'smem constant byte address 0x4 - core index']
  #allocation1 [shape = 'u32[144,128]{1,0:T(1,128)}', space=vmem, size = 0x12000, scoped, tag = 'internal scratch']
  #allocation2 [shape = 'f32[8,1]{1,0:T(8,128)}', space=vmem, size = 0x1000, scoped, tag = 'scratch operand']
  %s0 = inlined_call_operand.hbm [shape: f32[8,500], index: 0, kind: input, shape index: {}]
  %s1 = inlined_call_operand.hbm [shape: f32[256,256], index: 1, kind: input, shape index: {}]
  %s2 = inlined_call_operand.vmem [shape: f32[1,256], index: 2, kind: input, shape index: {}]
  %s3 = inlined_call_operand.hbm [shape: f32[8,500], index: 3, kind: output, shape index: {}]
  %s4 = sld [smem:[#allocation0]]
  $region34: #{tpu_custom_call.1} parent=0
    _
  %s6 = ssub.s32 1, %s4
  %s7 = scalar_select 0, %s6, %s4
  $region1: #{tpu_custom_call.1} parent=0
    #allocation3 [shape = 'u8[16384]{0}', space=vmem, size = 0x4000, scoped, tag = 'input window, operand 0, single buffered']
    #allocation4 [shape = 's32[1]{0}', space=sflag, size = 0x4, scoped, tag = 'scoped memory for tpu_custom_call.1']
    #allocation5 [shape = 's32[1]{0}', space=sflag, size = 0x4, scoped, tag = 'scoped memory for tpu_custom_call.1']
    #allocation6 [shape = 'u8[262144]{0}', space=vmem, size = 0x40000, scoped, tag = 'input window, operand 1, single buffered']
    #allocation7 [shape = 's32[1]{0}', space=sflag, size = 0x4, scoped, tag = 'scoped memory for tpu_custom_call.1']
    #allocation8 [shape = 'u8[16384]{0}', space=vmem, size = 0x4000, scoped, tag = 'output window, operand 0, single buffered']
    %8 = vsyncpa [#allocation4], 0
    %9 = vsyncpa [#allocation7], 0
    %10 = vsyncpa [#allocation5], 0
    // Predicated region
    $region2: #{tpu_custom_call.1} parent=1 // pred_check
      _
    $region3: #{tpu_custom_call.1} parent=1 // pred_check_branch
      %12 = sbr.rel (0) target = $region5
    $region4: #{tpu_custom_call.1} parent=1 // pred_region
      %s14 = ssub.s32 512, 512
      %15 = vsyncadd [#allocation4], %s14
      %s17 = sshll.u32 [#allocation3], 4
      %s18 = int_to_ptr.vmem [resolvable:$true] %s17
      %20 = dma.hbm_to_vmem [thread:$0]  %s0, 512, %s18, [#allocation4]
    $region5: #{tpu_custom_call.1} parent=1 // pred_fallthru
      _
    // Predicated region
    $region6: #{tpu_custom_call.1} parent=1 // pred_check
      _
    $region7: #{tpu_custom_call.1} parent=1 // pred_check_branch
      %22 = sbr.rel (0) target = $region9
    $region8: #{tpu_custom_call.1} parent=1 // pred_region
      %s24 = ssub.s32 8192, 8192
      %25 = vsyncadd [#allocation7], %s24
      %s26 = sshll.u32 [#allocation6], 4
      %s27 = int_to_ptr.vmem [resolvable:$true] %s26
      %32 = dma.hbm_to_vmem [thread:$0]  %s1, 8192, %s27, [#allocation7], 256, 256, 16
    $region9: #{tpu_custom_call.1} parent=1 // pred_fallthru
      _
    // Predicated region
    $region10: #{tpu_custom_call.1} parent=1 // pred_check
      _
    $region11: #{tpu_custom_call.1} parent=1 // pred_check_branch
      %34 = sbr.rel (0) target = $region13
    $region12: #{tpu_custom_call.1} parent=1 // pred_region
      _
    $region13: #{tpu_custom_call.1} parent=1 // pred_fallthru
      _
    // Predicated region
    $region14: #{tpu_custom_call.1} parent=1 // pred_check
      _
    $region15: #{tpu_custom_call.1} parent=1 // pred_check_branch
      %36 = sbr.rel (0) target = $region17
    $region16: #{tpu_custom_call.1} parent=1 // pred_region
      %37 = dma.done [#allocation4], 512
    $region17: #{tpu_custom_call.1} parent=1 // pred_fallthru
      _
    // Predicated region
    $region18: #{tpu_custom_call.1} parent=1 // pred_check
      _
    $region19: #{tpu_custom_call.1} parent=1 // pred_check_branch
      %39 = sbr.rel (0) target = $region21
    $region20: #{tpu_custom_call.1} parent=1 // pred_region
      %40 = dma.done [#allocation7], 8192
    $region21: #{tpu_custom_call.1} parent=1 // pred_fallthru
      _
    %p41 = scmp.eq.s32.totalorder 0, 0
    // Predicated region
    $region22: #{tpu_custom_call.1} parent=1 // pred_check
      %p42 = pneg %p41
    $region23: #{tpu_custom_call.1} parent=1 // pred_check_branch
      %44 = sbr.rel (%p42) target = $region25
    $region24: #{tpu_custom_call.1} parent=1 // pred_region
      %vm45 = vcmask 7168
      %46 = vst.msk [vmem:[#allocation2] sm:$0xff] %vm45, 1.0
    $region25: #{tpu_custom_call.1} parent=1 // pred_fallthru
      _
    %v47 = vld [vmem:[#allocation6] sm:$0xff]
    %v48 = vld [vmem:[#allocation6 + $0x8] sm:$0xff]
    %v49 = vld [vmem:[#allocation6 + $0x10] sm:$0xff]
    %v50 = vld [vmem:[#allocation6 + $0x18] sm:$0xff]
    %v51 = vld [vmem:[#allocation6 + $0x20] sm:$0xff]
    %v52 = vld [vmem:[#allocation6 + $0x28] sm:$0xff]
    %v53 = vld [vmem:[#allocation6 + $0x30] sm:$0xff]
    %v54 = vld [vmem:[#allocation6 + $0x38] sm:$0xff]
    %v55 = vld [vmem:[#allocation6 + $0x40] sm:$0xff]
    %v56 = vld [vmem:[#allocation6 + $0x48] sm:$0xff]
    %v57 = vld [vmem:[#allocation6 + $0x50] sm:$0xff]
    %v58 = vld [vmem:[#allocation6 + $0x58] sm:$0xff]
    %v59 = vld [vmem:[#allocation6 + $0x60] sm:$0xff]
    %v60 = vld [vmem:[#allocation6 + $0x68] sm:$0xff]
    %v61 = vld [vmem:[#allocation6 + $0x70] sm:$0xff]
    %v62 = vld [vmem:[#allocation6 + $0x78] sm:$0xff]
    %v63 = vld [vmem:[#allocation6 + $0x80] sm:$0xff]
    %v64 = vld [vmem:[#allocation6 + $0x88] sm:$0xff]
    %v65 = vld [vmem:[#allocation6 + $0x90] sm:$0xff]
    %v66 = vld [vmem:[#allocation6 + $0x98] sm:$0xff]
    %v67 = vld [vmem:[#allocation6 + $0xa0] sm:$0xff]
    %v68 = vld [vmem:[#allocation6 + $0xa8] sm:$0xff]
    %v69 = vld [vmem:[#allocation6 + $0xb0] sm:$0xff]
    %v70 = vld [vmem:[#allocation6 + $0xb8] sm:$0xff]
    %v71 = vld [vmem:[#allocation6 + $0xc0] sm:$0xff]
    %v72 = vld [vmem:[#allocation6 + $0xc8] sm:$0xff]
    %v73 = vld [vmem:[#allocation6 + $0xd0] sm:$0xff]
    %v74 = vld [vmem:[#allocation6 + $0xd8] sm:$0xff]
    %v75 = vld [vmem:[#allocation6 + $0xe0] sm:$0xff]
    %v76 = vld [vmem:[#allocation6 + $0xe8] sm:$0xff]
    %v77 = vld [vmem:[#allocation6 + $0xf0] sm:$0xff]
    %v78 = vld [vmem:[#allocation6 + $0xf8] sm:$0xff]
    %v79 = vld [vmem:[#allocation6 + $0x100] sm:$0xff]
    %v80 = vld [vmem:[#allocation6 + $0x108] sm:$0xff]
    %v81 = vld [vmem:[#allocation6 + $0x110] sm:$0xff]
    %v82 = vld [vmem:[#allocation6 + $0x118] sm:$0xff]
    %v83 = vld [vmem:[#allocation6 + $0x120] sm:$0xff]
    %v84 = vld [vmem:[#allocation6 + $0x128] sm:$0xff]
    %v85 = vld [vmem:[#allocation6 + $0x130] sm:$0xff]
    %v86 = vld [vmem:[#allocation6 + $0x138] sm:$0xff]
    %v87 = vld [vmem:[#allocation6 + $0x140] sm:$0xff]
    %v88 = vld [vmem:[#allocation6 + $0x148] sm:$0xff]
    %v89 = vld [vmem:[#allocation6 + $0x150] sm:$0xff]
    %v90 = vld [vmem:[#allocation6 + $0x158] sm:$0xff]
    %v91 = vld [vmem:[#allocation6 + $0x160] sm:$0xff]
    %v92 = vld [vmem:[#allocation6 + $0x168] sm:$0xff]
    %v93 = vld [vmem:[#allocation6 + $0x170] sm:$0xff]
    %v94 = vld [vmem:[#allocation6 + $0x178] sm:$0xff]
    %v95 = vld [vmem:[#allocation6 + $0x180] sm:$0xff]
    %v96 = vld [vmem:[#allocation6 + $0x188] sm:$0xff]
    %v97 = vld [vmem:[#allocation6 + $0x190] sm:$0xff]
    %v98 = vld [vmem:[#allocation6 + $0x198] sm:$0xff]
    %v99 = vld [vmem:[#allocation6 + $0x1a0] sm:$0xff]
    %v100 = vld [vmem:[#allocation6 + $0x1a8] sm:$0xff]
    %v101 = vld [vmem:[#allocation6 + $0x1b0] sm:$0xff]
    %v102 = vld [vmem:[#allocation6 + $0x1b8] sm:$0xff]
    %v103 = vld [vmem:[#allocation6 + $0x1c0] sm:$0xff]
    %v104 = vld [vmem:[#allocation6 + $0x1c8] sm:$0xff]
    %v105 = vld [vmem:[#allocation6 + $0x1d0] sm:$0xff]
    %v106 = vld [vmem:[#allocation6 + $0x1d8] sm:$0xff]
    %v107 = vld [vmem:[#allocation6 + $0x1e0] sm:$0xff]
    %v108 = vld [vmem:[#allocation6 + $0x1e8] sm:$0xff]
    %v109 = vld [vmem:[#allocation6 + $0x1f0] sm:$0xff]
    %v110 = vld [vmem:[#allocation6 + $0x1f8] sm:$0xff]
    %v111 = vld [vmem:[%s2] sm:$0x3]
    %v112 = vld [vmem:[#allocation2] sm:$0xff]
    %v113 = vld [vmem:[#allocation3] sm:$0xff]
    %v114 = vld [vmem:[#allocation3 + $0x8] sm:$0xff]
    %v115 = vlaneseq
    %v116 = vand.u32 %v115, 127
    %v117 = vadd.s32 %v116, 128
    %s118 = smul.u32 0, 512
    %v119 = vstv %s118
    %v120 = vadd.s32 %v116, %v119
    %v121 = vadd.s32 %v117, %v119
    %vm122 = vcmp.lt.s32.totalorder %v120, 500
    %vm123 = vcmp.lt.s32.totalorder %v121, 500
    %v124 = vsel %vm122, 1, 0
    %v125 = vsel %vm123, 1, 0
    %vm126 = vcmp.eq.s32.totalorder %v124, 1
    %vm127 = vcmp.eq.s32.totalorder %v125, 1
    %v128 = vsel %vm126, %v113, 0.0
    %v129 = vsel %vm127, %v114, 0.0
    %v130 = vmax.f32 %v128, 1e-05
    %v131 = vmax.f32 %v129, 1e-05
    %v132 = vmul.f32 %v130, 100000.0
    %v133 = vmul.f32 %v131, 100000.0
    %v134 = vsub.f32 %v132, 1.0
    %v135 = vsub.f32 %v133, 1.0
    %vm136 = vcmp.lt.f32.partialorder %v134, 1e-06
    %vm137 = vcmp.lt.f32.partialorder %v135, 1e-06
    %v138 = vmul.f32 %v134, 0.5
    %v139 = vmul.f32 %v135, 0.5
    %v140 = vsub.f32 1.0, %v138
    %v141 = vsub.f32 1.0, %v139
    %v142 = vlog2.pop %v132
    %v143 = vmul.f32 %v142, 0.6931472
    %v144 = vlog2.pop %v133
    %v145 = vmul.f32 %v144, 0.6931472
    %v146 = vrcp.pop %v134
    %v147 = vrcp.pop %v135
    %v148 = vmul.f32 %v143, %v146
    %v149 = vmul.f32 %v145, %v147
    %v150 = vsel %vm136, %v140, %v148
    %v151 = vsel %vm137, %v141, %v149
    %153 = vset.pattern.permute.xlu0 0
    %154 = vperm.xlu0 %153, %v112
    %v155 = vpop.permute.xlu0 %154
    %v158 = vlaneseq
    %v159 = vshrl.u32 %v158, 7
    %v160 = vsub.s32 0, %v159
    %v161 = vrot.slane %v111, %v160
    %v162 = vlaneseq
    %v163 = vshrl.u32 %v162, 7
    %v164 = vsub.s32 1, %v163
    %v165 = vrot.slane %v111, %v164
    %v168 = vmul.f32 %v155, %v161
    %v169 = vmul.f32 %v155, %v165
    %170 = vmatprep.subr.mxu0 %v78
    %171 = vmatpush1.msra.mxu0 %v77
    %172 = vmatprep.subr.mxu0 %v76
    %173 = vmatpush1.msra.mxu0 %v75
    %174 = vmatprep.subr.mxu0 %v74
    %175 = vmatpush1.msra.mxu0 %v73
    %176 = vmatprep.subr.mxu0 %v72
    %177 = vmatpush1.msra.mxu0 %v71
    %178 = vmatprep.subr.mxu0 %v70
    %179 = vmatpush1.msra.mxu0 %v69
    %180 = vmatprep.subr.mxu0 %v68
    %181 = vmatpush1.msra.mxu0 %v67
    %182 = vmatprep.subr.mxu0 %v66
    %183 = vmatpush1.msra.mxu0 %v65
    %184 = vmatprep.subr.mxu0 %v64
    %185 = vmatpush1.msra.mxu0 %v63
    %186 = vmatprep.subr.mxu0 %v62
    %187 = vmatpush1.msra.mxu0 %v61
    %188 = vmatprep.subr.mxu0 %v60
    %189 = vmatpush1.msra.mxu0 %v59
    %190 = vmatprep.subr.mxu0 %v58
    %191 = vmatpush1.msra.mxu0 %v57
    %192 = vmatprep.subr.mxu0 %v56
    %193 = vmatpush1.msra.mxu0 %v55
    %194 = vmatprep.subr.mxu0 %v54
    %195 = vmatpush1.msra.mxu0 %v53
    %196 = vmatprep.subr.mxu0 %v52
    %197 = vmatpush1.msra.mxu0 %v51
    %198 = vmatprep.subr.mxu0 %v50
    %199 = vmatpush1.msra.mxu0 %v49
    %200 = vmatprep.subr.mxu0 %v48
    %201 = vmatpush1.msra.mxu0 %v47
    %202 = vmatprep.subr.mxu0 %v110
    %203 = vmatpush2.msra.mxu0 %v109
    %204 = vmatprep.subr.mxu0 %v108
    %205 = vmatpush2.msra.mxu0 %v107
    %206 = vmatprep.subr.mxu0 %v106
    %207 = vmatpush2.msra.mxu0 %v105
    %208 = vmatprep.subr.mxu0 %v104
    %209 = vmatpush2.msra.mxu0 %v103
    %210 = vmatprep.subr.mxu0 %v102
    %211 = vmatpush2.msra.mxu0 %v101
    %212 = vmatprep.subr.mxu0 %v100
    %213 = vmatpush2.msra.mxu0 %v99
    %214 = vmatprep.subr.mxu0 %v98
    %215 = vmatpush2.msra.mxu0 %v97
    %216 = vmatprep.subr.mxu0 %v96
    %217 = vmatpush2.msra.mxu0 %v95
    %218 = vmatprep.subr.mxu0 %v94
    %219 = vmatpush2.msra.mxu0 %v93
    %220 = vmatprep.subr.mxu0 %v92
    %221 = vmatpush2.msra.mxu0 %v91
    %222 = vmatprep.subr.mxu0 %v90
    %223 = vmatpush2.msra.mxu0 %v89
    %224 = vmatprep.subr.mxu0 %v88
    %225 = vmatpush2.msra.mxu0 %v87
    %226 = vmatprep.subr.mxu0 %v86
    %227 = vmatpush2.msra.mxu0 %v85
    %228 = vmatprep.subr.mxu0 %v84
    %229 = vmatpush2.msra.mxu0 %v83
    %230 = vmatprep.subr.mxu0 %v82
    %231 = vmatpush2.msra.mxu0 %v81
    %232 = vmatprep.subr.mxu0 %v80
    %233 = vmatpush2.msra.mxu0 %v79
    %234 = vmatprep.mubr.f32.mxu0 %v151
    %235 = vmatmul.mubr.f32.gmra.mxu0 %v150
    %v236 = vpop.f32.mrf.mxu0
    %v237 = vadd.f32 %v168, %v236
    %v238 = vpop.f32.mrf.mxu0
    %v239 = vadd.f32 %v169, %v238
    %240 = vdwg.mxu0
    %v241 = vmul.f32 %v128, %v237
    %v242 = vmul.f32 %v129, %v239
    %v243 = vmul.f32 %v241, 100000.0
    %v244 = vmul.f32 %v242, 100000.0
    %245 = vst [vmem:[#allocation8] sm:$0xff] %v243
    %246 = vst [vmem:[#allocation8 + $0x8] sm:$0xff] %v244
    %v247 = vld [vmem:[#allocation3 + $0x10] sm:$0xff]
    %v248 = vld [vmem:[#allocation3 + $0x18] sm:$0xff]
    %s249 = sadd.s32 %s118, 256
    %v250 = vstv %s249
    %v251 = vadd.s32 %v116, %v250
    %v252 = vadd.s32 %v117, %v250
    %vm253 = vcmp.lt.s32.totalorder %v251, 500
    %vm254 = vcmp.lt.s32.totalorder %v252, 500
    %v255 = vsel %vm253, 1, 0
    %v256 = vsel %vm254, 1, 0
    %vm257 = vcmp.eq.s32.totalorder %v255, 1
    %vm258 = vcmp.eq.s32.totalorder %v256, 1
    %v259 = vsel %vm257, %v247, 0.0
    %v260 = vsel %vm258, %v248, 0.0
    %v261 = vmax.f32 %v259, 1e-05
    %v262 = vmax.f32 %v260, 1e-05
    %v263 = vmul.f32 %v261, 100000.0
    %v264 = vmul.f32 %v262, 100000.0
    %v265 = vsub.f32 %v263, 1.0
    %v266 = vsub.f32 %v264, 1.0
    %vm267 = vcmp.lt.f32.partialorder %v265, 1e-06
    %vm268 = vcmp.lt.f32.partialorder %v266, 1e-06
    %v269 = vmul.f32 %v265, 0.5
    %v270 = vmul.f32 %v266, 0.5
    %v271 = vsub.f32 1.0, %v269
    %v272 = vsub.f32 1.0, %v270
    %v273 = vlog2.pop %v263
    %v274 = vmul.f32 %v273, 0.6931472
    %v275 = vlog2.pop %v264
    %v276 = vmul.f32 %v275, 0.6931472
    %v277 = vrcp.pop %v265
    %v278 = vrcp.pop %v266
    %v279 = vmul.f32 %v274, %v277
    %v280 = vmul.f32 %v276, %v278
    %v281 = vsel %vm267, %v271, %v279
    %v282 = vsel %vm268, %v272, %v280
    %284 = vset.pattern.permute.xlu0 127
    %285 = vperm.xlu0 %284, %v239
    %v286 = vpop.permute.xlu0 %285
    %v288 = vmul.f32 %v286, %v161
    %v289 = vmul.f32 %v286, %v165
    %290 = vmatprep.subr.mxu0 %v78
    %291 = vmatpush1.msra.mxu0 %v77
    %292 = vmatprep.subr.mxu0 %v76
    %293 = vmatpush1.msra.mxu0 %v75
    %294 = vmatprep.subr.mxu0 %v74
    %295 = vmatpush1.msra.mxu0 %v73
    %296 = vmatprep.subr.mxu0 %v72
    %297 = vmatpush1.msra.mxu0 %v71
    %298 = vmatprep.subr.mxu0 %v70
    %299 = vmatpush1.msra.mxu0 %v69
    %300 = vmatprep.subr.mxu0 %v68
    %301 = vmatpush1.msra.mxu0 %v67
    %302 = vmatprep.subr.mxu0 %v66
    %303 = vmatpush1.msra.mxu0 %v65
    %304 = vmatprep.subr.mxu0 %v64
    %305 = vmatpush1.msra.mxu0 %v63
    %306 = vmatprep.subr.mxu0 %v62
    %307 = vmatpush1.msra.mxu0 %v61
    %308 = vmatprep.subr.mxu0 %v60
    %309 = vmatpush1.msra.mxu0 %v59
    %310 = vmatprep.subr.mxu0 %v58
    %311 = vmatpush1.msra.mxu0 %v57
    %312 = vmatprep.subr.mxu0 %v56
    %313 = vmatpush1.msra.mxu0 %v55
    %314 = vmatprep.subr.mxu0 %v54
    %315 = vmatpush1.msra.mxu0 %v53
    %316 = vmatprep.subr.mxu0 %v52
    %317 = vmatpush1.msra.mxu0 %v51
    %318 = vmatprep.subr.mxu0 %v50
    %319 = vmatpush1.msra.mxu0 %v49
    %320 = vmatprep.subr.mxu0 %v48
    %321 = vmatpush1.msra.mxu0 %v47
    %322 = vmatprep.subr.mxu0 %v110
    %323 = vmatpush2.msra.mxu0 %v109
    %324 = vmatprep.subr.mxu0 %v108
    %325 = vmatpush2.msra.mxu0 %v107
    %326 = vmatprep.subr.mxu0 %v106
    %327 = vmatpush2.msra.mxu0 %v105
    %328 = vmatprep.subr.mxu0 %v104
    %329 = vmatpush2.msra.mxu0 %v103
    %330 = vmatprep.subr.mxu0 %v102
    %331 = vmatpush2.msra.mxu0 %v101
    %332 = vmatprep.subr.mxu0 %v100
    %333 = vmatpush2.msra.mxu0 %v99
    %334 = vmatprep.subr.mxu0 %v98
    %335 = vmatpush2.msra.mxu0 %v97
    %336 = vmatprep.subr.mxu0 %v96
    %337 = vmatpush2.msra.mxu0 %v95
    %338 = vmatprep.subr.mxu0 %v94
    %339 = vmatpush2.msra.mxu0 %v93
    %340 = vmatprep.subr.mxu0 %v92
    %341 = vmatpush2.msra.mxu0 %v91
    %342 = vmatprep.subr.mxu0 %v90
    %343 = vmatpush2.msra.mxu0 %v89
    %344 = vmatprep.subr.mxu0 %v88
    %345 = vmatpush2.msra.mxu0 %v87
    %346 = vmatprep.subr.mxu0 %v86
    %347 = vmatpush2.msra.mxu0 %v85
    %348 = vmatprep.subr.mxu0 %v84
    %349 = vmatpush2.msra.mxu0 %v83
    %350 = vmatprep.subr.mxu0 %v82
    %351 = vmatpush2.msra.mxu0 %v81
    %352 = vmatprep.subr.mxu0 %v80
    %353 = vmatpush2.msra.mxu0 %v79
    %354 = vmatprep.mubr.f32.mxu0 %v282
    %355 = vmatmul.mubr.f32.gmra.mxu0 %v281
    %v356 = vpop.f32.mrf.mxu0
    %v357 = vadd.f32 %v288, %v356
    %v358 = vpop.f32.mrf.mxu0
    %v359 = vadd.f32 %v289, %v358
    %360 = vdwg.mxu0
    %v361 = vmul.f32 %v259, %v357
    %v362 = vmul.f32 %v260, %v359
    %v363 = vmul.f32 %v361, 100000.0
    %v364 = vmul.f32 %v362, 100000.0
    %365 = vst [vmem:[#allocation8 + $0x10] sm:$0xff] %v363
    %366 = vst [vmem:[#allocation8 + $0x18] sm:$0xff] %v364
    %368 = vrot.lane.b32.xlu0 %v359, 1
    %v369 = vpop.permute.xlu0 %368
    %vm371 = vcmask 7168
    %372 = vst.msk [vmem:[#allocation2] sm:$0xff] %vm371, %v369
    // Predicated region
    $region26: #{tpu_custom_call.1} parent=1 // pred_check
      _
    $region27: #{tpu_custom_call.1} parent=1 // pred_check_branch
      %374 = sbr.rel (0) target = $region29
    $region28: #{tpu_custom_call.1} parent=1 // pred_region
      %s376 = ssub.s32 512, 512
      %377 = vsyncadd [#allocation5], %s376
      %s379 = sshll.u32 [#allocation8], 4
      %s380 = int_to_ptr.vmem [resolvable:$true] %s379
      %382 = dma.vmem_to_hbm [thread:$0]  %s380, 512, %s3, [#allocation5]
    $region29: #{tpu_custom_call.1} parent=1 // pred_fallthru
      _
    // Predicated region
    $region30: #{tpu_custom_call.1} parent=1 // pred_check
      _
    $region31: #{tpu_custom_call.1} parent=1 // pred_check_branch
      %384 = sbr.rel (0) target = $region33
    $region32: #{tpu_custom_call.1} parent=1 // pred_region
      %385 = dma.done [#allocation5], 512
    $region33: #{tpu_custom_call.1} parent=1 // pred_fallthru
      _
    %386 = vsyncpa [#allocation4], 1
    %387 = vsyncpa [#allocation7], 1
    %388 = vsyncpa [#allocation5], 1

</llo_original>
